<compile_context>
chip_gen: v7x
topology: tpu7x:2x2x1
jax: 0.10.0
libtpu: 0.0.40
codegen_flags: <defaults>
</compile_context>

<pallas_src>
import functools

import jax
import jax.numpy as jnp
from jax.experimental import pallas as pl
from jax.experimental.pallas import tpu as pltpu


def _round_up(x: int, m: int) -> int:
    return ((x + m - 1) // m) * m


def _vmem_capacity_bytes() -> int:
    # Generation-aware physical VMEM (v5e/v6e: 128 MiB, v7x: 64 MiB per TC).
    try:
        cap = int(pltpu.get_tpu_info().vmem_capacity_bytes)
        if cap >= (16 << 20):
            return cap
    except Exception:
        pass
    return 64 << 20  # conservative default: v7x per-core VMEM


def _pick_tile_m(M, H, C, in_item, out_item, vmem_cap):
    # Sub-32-bit dtypes pack along sublanes: bf16 -> 16, int8/fp8 -> 32.
    sub = max(8, 32 // in_item)
    # Target ~8 MiB per streamed x tile (amortizes ~0.35 us per grid step).
    tm = (8 << 20) // max(1, H * in_item)
    tm = max(512, min(2048, tm))
    # Cap so double-buffered x (+ out) tiles stay within the streaming VMEM
    # budget: <= half of physical VMEM (32 MiB on v7x, 64 MiB on v5e/v6e).
    stream_budget = min(vmem_cap // 2, 64 << 20)
    per_row_bytes = 2 * (H * in_item + max(C, 1) * out_item)
    tm = min(tm, max(sub, stream_budget // per_row_bytes))
    # Never exceed the (sublane-rounded) problem size.
    tm = min(tm, _round_up(M, sub))
    tm = max(sub, (tm // sub) * sub)
    return tm, sub


def _vh_kernel_c1(x_ref, w_ref, b_ref, o_ref, *, use_tanh: bool):
    # x_ref: [tm, H]  w_ref: [1, H] (lane-dense row)  b_ref: SMEM (1,) scalar
    # o_ref: [1, 1, tm] (lane-dense output row)
    y = jax.lax.dot_general(
        w_ref[...], x_ref[...],
        dimension_numbers=(((1,), (1,)), ((), ())),      # contract over H
        preferred_element_type=jnp.float32)               # (1, tm) on the MXU
    y = y + b_ref[0]                                       # scalar bias (SMEM)
    if use_tanh:
        y = jnp.tanh(y)                                    # EUP transcendental
    o_ref[...] = y.reshape(o_ref.shape).astype(o_ref.dtype)


def _vh_kernel_general(x_ref, w_ref, b_ref, o_ref, *, use_tanh: bool):
    # x_ref: [tm, H]  w_ref: [H, C]  b_ref: [1, C] VMEM  o_ref: [tm, C]
    y = jnp.dot(x_ref[...], w_ref[...], preferred_element_type=jnp.float32)
    y = y + b_ref[...].astype(jnp.float32)
    if use_tanh:
        y = jnp.tanh(y)
    o_ref[...] = y.astype(o_ref.dtype)


def value_head_forward(hidden_states, weight, bias, *, use_tanh=True,
                       tile_m=None):
    """ValueHead forward.

    hidden_states: [B, S, H]; weight: [C, H] (PyTorch Linear layout); bias: [C].
    Streams the activation in its native dtype; accumulation/bias/tanh in f32.
    """
    B, S, H = hidden_states.shape
    C = weight.shape[0]
    M = B * S

    x2d = hidden_states.reshape(M, H)          # free row-major reshape
    in_dtype = x2d.dtype
    out_dtype = in_dtype
    in_item = jnp.dtype(in_dtype).itemsize
    out_item = jnp.dtype(out_dtype).itemsize

    vmem_cap = _vmem_capacity_bytes()
    tm, sub = _pick_tile_m(M, H, C, in_item, out_item, vmem_cap)
    if tile_m is not None:                     # explicit override (tests/tuning)
        tm = max(sub, (min(int(tile_m), _round_up(M, sub)) // sub) * sub)
    grid_m = pl.cdiv(M, tm)

    w_c = weight.astype(in_dtype)              # tiny cast; matmul dtype = stream dtype
    bias_f32 = bias.astype(jnp.float32)

    # Scoped VMEM: actual need (double-buffered x + out, resident W) + headroom,
    # kept well under the physical capacity of the current generation.
    vmem_need = (2 * tm * H * in_item + 2 * tm * max(C, 1) * out_item
                 + H * C * in_item + 512 + (4 << 20))
    vmem_limit = int(min(max(vmem_need, 16 << 20), int(vmem_cap * 0.9)))

    cost = pl.CostEstimate(
        flops=2 * grid_m * tm * H * C,
        transcendentals=(grid_m * tm * C) if use_tanh else 0,
        bytes_accessed=(M * H * in_item + H * C * in_item + 4 * C
                        + grid_m * tm * C * out_item),
    )
    cparams = pltpu.CompilerParams(
        dimension_semantics=("parallel",),     # rows shard across TCs on v7x
        vmem_limit_bytes=vmem_limit,
    )

    if C == 1:
        # Lane-dense C==1 path: weight stays a [1, H] row, result is a (1, tm)
        # row, output blocks are (1, 1, tm) -> unmasked lane-dense stores.
        kernel = functools.partial(_vh_kernel_c1, use_tanh=use_tanh)
        out3 = pl.pallas_call(
            kernel,
            out_shape=jax.ShapeDtypeStruct((grid_m, 1, tm), out_dtype),
            grid_spec=pltpu.PrefetchScalarGridSpec(
                num_scalar_prefetch=0,
                grid=(grid_m,),
                in_specs=[
                    pl.BlockSpec((tm, H), lambda i: (i, 0)),    # streamed x
                    pl.BlockSpec((1, H), lambda i: (0, 0)),     # resident W row
                    pl.BlockSpec(memory_space=pltpu.MemorySpace.SMEM),  # bias
                ],
                out_specs=pl.BlockSpec((1, 1, tm), lambda i: (i, 0, 0)),
            ),
            compiler_params=cparams,
            cost_estimate=cost,
        )(x2d, w_c.reshape(1, H), bias_f32.reshape(1))
        # (grid_m, 1, tm) flattens in exact row order; drop the ragged tail
        # (garbage rows of the last partial tile are never read).
        return out3.reshape(grid_m * tm, 1)[:M].reshape(B, S, 1)

    # General-C path (e.g. summary_proj_to_labels=False -> C == hidden_size).
    kernel = functools.partial(_vh_kernel_general, use_tanh=use_tanh)
    out2d = pl.pallas_call(
        kernel,
        out_shape=jax.ShapeDtypeStruct((M, C), out_dtype),
        grid_spec=pltpu.PrefetchScalarGridSpec(
            num_scalar_prefetch=0,
            grid=(grid_m,),
            in_specs=[
                pl.BlockSpec((tm, H), lambda i: (i, 0)),        # streamed x
                pl.BlockSpec((H, C), lambda i: (0, 0)),         # resident W^T
                pl.BlockSpec((1, C), lambda i: (0, 0)),         # resident bias
            ],
            out_specs=pl.BlockSpec((tm, C), lambda i: (i, 0)),  # ragged tail masked
        ),
        compiler_params=cparams,
        cost_estimate=cost,
    )(x2d, w_c.T, bias_f32.reshape(1, C))
    return out2d.reshape(B, S, C)


if __name__ == "__main__":
    key = jax.random.PRNGKey(0)
    k_x, k_w, k_b = jax.random.split(key, 3)

    # Canonical ValueHead config: num_labels = 1 -> one scalar per token.
    B, S, H = 2, 8, 32
    NUM_LABELS = 1
    hidden_states = jax.random.normal(k_x, (B, S, H), dtype=jnp.float32)
    weight = jax.random.normal(k_w, (NUM_LABELS, H), dtype=jnp.float32) * 0.02
    bias = jax.random.normal(k_b, (NUM_LABELS,), dtype=jnp.float32) * 0.02

    out = jax.block_until_ready(value_head_forward(hidden_states, weight, bias))
    ref = jnp.tanh(hidden_states @ weight.T + bias)
    assert out.shape == (B, S, NUM_LABELS)
    assert jnp.allclose(out, ref, atol=1e-5, rtol=1e-5)

    # Ragged / multi-step grid: M = 120 rows with tile_m = 32 -> 4 pipelined
    # steps, last tile partially OOB — handled without any wrapper jnp.pad.
    B2, S2, H2 = 3, 40, 128
    k2x, k2w, k2b = jax.random.split(jax.random.PRNGKey(0), 3)
    hs2 = jax.random.normal(k2x, (B2, S2, H2), dtype=jnp.float32)
    w2 = jax.random.normal(k2w, (NUM_LABELS, H2), dtype=jnp.float32) * 0.02
    b2 = jax.random.normal(k2b, (NUM_LABELS,), dtype=jnp.float32) * 0.02
    out2 = jax.block_until_ready(value_head_forward(hs2, w2, b2, tile_m=32))
    ref2 = jnp.tanh(hs2 @ w2.T + b2)
    assert out2.shape == (B2, S2, NUM_LABELS)
    assert jnp.allclose(out2, ref2, atol=1e-5, rtol=1e-5)

    # Native-bf16 streaming (input already bf16; no wrapper f32->bf16 cast).
    hs2_bf16 = hs2.astype(jnp.bfloat16)
    out3 = jax.block_until_ready(value_head_forward(hs2_bf16, w2, b2, tile_m=32))
    assert jnp.allclose(out3.astype(jnp.float32), ref2, atol=3e-2, rtol=3e-2)

    # General-C path (covers the num_classes = hidden_size config branch).
    C4 = 8
    k4w, k4b = jax.random.split(jax.random.PRNGKey(1), 2)
    w4 = jax.random.normal(k4w, (C4, H2), dtype=jnp.float32) * 0.02
    b4 = jax.random.normal(k4b, (C4,), dtype=jnp.float32) * 0.02
    out4 = jax.block_until_ready(value_head_forward(hs2, w4, b4, tile_m=32))
    ref4 = jnp.tanh(hs2 @ w4.T + b4)
    assert out4.shape == (B2, S2, C4)
    assert jnp.allclose(out4, ref4, atol=1e-5, rtol=1e-5)

    print("KERNEL_OK")
</pallas_src>

<mosaic_0001>
module attributes {stable_mosaic.version = 11 : i64} {
  func.func @_vh_kernel_c1(%arg0: i32, %arg1: memref<16x32xf32, #tpu.memory_space<vmem>>, %arg2: memref<1x32xf32, #tpu.memory_space<vmem>>, %arg3: memref<1xf32, #tpu.memory_space<smem>>, %arg4: memref<1x1x16xf32, #tpu.memory_space<vmem>>) attributes {dimension_semantics = [#tpu.dimension_semantics<parallel>], iteration_bounds = array<i64: 1>, scalar_prefetch = 0 : i64, scratch_operands = 0 : i64, tpu.core_type = #tpu.core_type<tc>, window_params = [{transform_indices = @transform_0, window_bounds = array<i64: 16, 32>}, {pipeline_mode = #tpu.pipeline_mode<synchronous>, transform_indices = @transform_1, window_bounds = array<i64: 1, 32>}, {transform_indices = @transform_2, window_bounds = array<i64: 1>}, {transform_indices = @transform_3, window_bounds = array<i64: 1, 1, 16>}]} {
    %c0 = arith.constant 0 : index
    %c0_0 = arith.constant 0 : index
    %0 = vector.load %arg2[%c0, %c0_0] : memref<1x32xf32, #tpu.memory_space<vmem>>, vector<1x32xf32>
    %c0_1 = arith.constant 0 : index
    %c0_2 = arith.constant 0 : index
    %1 = vector.load %arg1[%c0_1, %c0_2] : memref<16x32xf32, #tpu.memory_space<vmem>>, vector<16x32xf32>
    %cst = arith.constant dense<0.000000e+00> : vector<1x16xf32>
    %2 = tpu.matmul %0, %1, %cst {dimension_numbers = #tpu.dot_dimension_numbers<[1], [1], [0], [0], [0, 0, 1, 0], [], []>} : vector<1x32xf32>, vector<16x32xf32>, vector<1x16xf32> -> vector<1x16xf32>
    %c0_3 = arith.constant 0 : index
    %3 = memref.load %arg3[%c0_3] : memref<1xf32, #tpu.memory_space<smem>>
    %4 = vector.broadcast %3 : f32 to vector<1x16xf32>
    %5 = arith.addf %2, %4 : vector<1x16xf32>
    %6 = math.tanh %5 : vector<1x16xf32>
    %7 = vector.shape_cast %6 : vector<1x16xf32> to vector<1x1x16xf32>
    %c0_4 = arith.constant 0 : index
    %c0_5 = arith.constant 0 : index
    %c0_6 = arith.constant 0 : index
    %8 = vector.load %arg4[%c0_4, %c0_5, %c0_6] : memref<1x1x16xf32, #tpu.memory_space<vmem>>, vector<1x1x16xf32>
    tpu.vector_store %arg4[%c0_4, %c0_5, %c0_6], %7 {strides = array<i32>} : memref<1x1x16xf32, #tpu.memory_space<vmem>>, vector<1x1x16xf32>,
    return
  }
  func.func @transform_0(%arg0: i32) -> (i32, i32) {
    %c0_i32 = arith.constant 0 : i32
    %c0_i32_0 = arith.constant 0 : i32
    return %arg0, %c0_i32 : i32, i32
  }
  func.func @transform_1(%arg0: i32) -> (i32, i32) {
    %c0_i32 = arith.constant 0 : i32
    %c0_i32_0 = arith.constant 0 : i32
    %c0_i32_1 = arith.constant 0 : i32
    return %c0_i32, %c0_i32_0 : i32, i32
  }
  func.func @transform_2(%arg0: i32) -> i32 {
    %c0_i32 = arith.constant 0 : i32
    %c0_i32_0 = arith.constant 0 : i32
    return %c0_i32 : i32
  }
  func.func @transform_3(%arg0: i32) -> (i32, i32, i32) {
    %c0_i32 = arith.constant 0 : i32
    %c0_i32_0 = arith.constant 0 : i32
    %c0_i32_1 = arith.constant 0 : i32
    return %arg0, %c0_i32, %c0_i32_0 : i32, i32, i32
  }
}

</mosaic_0001>

<llo_original>
// kernel: tpu_custom_call.1
$region0: #{tpu_custom_call.1}
  #allocation0 [shape = 'u32[]', space=smem, size = 0x4, offset = 0x4, fixed_abs, tag = 'smem constant byte address 0x4 - core index']
  #allocation1 [shape = 'u32[144,128]{1,0:T(1,128)}', space=vmem, size = 0x12000, scoped, tag = 'internal scratch']
  #allocation2 [shape = 'f32[1]{0:T(128)S(6)}', space=smem, size = 0x200, scoped, tag = 'scoped memory for tpu_custom_call.1']
  %s0 = inlined_call_operand.hbm [shape: f32[16,32], index: 0, kind: input, shape index: {}]
  %s1 = inlined_call_operand.vmem [shape: f32[1,32], index: 1, kind: input, shape index: {}]
  %s2 = inlined_call_operand.<no memory space> [shape: f32[1], index: 2, kind: input, shape index: {}]
  %s3 = inlined_call_operand.hbm [shape: f32[1,1,16], index: 3, kind: output, shape index: {}]
  %s4 = sld [smem:[#allocation0]]
  $region26: #{tpu_custom_call.1} parent=0
    _
  %s6 = ssub.s32 1, %s4
  %s7 = scalar_select 0, %s6, %s4
  %8 = sst [smem:[#allocation2]] %s2
  $region1: #{tpu_custom_call.1} parent=0
    #allocation3 [shape = 'u8[8192]{0}', space=vmem, size = 0x2000, scoped, tag = 'input window, operand 0, single buffered']
    #allocation4 [shape = 's32[1]{0}', space=sflag, size = 0x4, scoped, tag = 'scoped memory for tpu_custom_call.1']
    #allocation5 [shape = 's32[1]{0}', space=sflag, size = 0x4, scoped, tag = 'scoped memory for tpu_custom_call.1']
    #allocation6 [shape = 'u8[512]{0}', space=vmem, size = 0x400, scoped, tag = 'output window, operand 0, single buffered']
    %9 = vsyncpa [#allocation4], 0
    %10 = vsyncpa [#allocation5], 0
    // Predicated region
    $region2: #{tpu_custom_call.1} parent=1 // pred_check
      _
    $region3: #{tpu_custom_call.1} parent=1 // pred_check_branch
      %12 = sbr.rel (0) target = $region5
    $region4: #{tpu_custom_call.1} parent=1 // pred_region
      %s14 = ssub.s32 256, 256
      %15 = vsyncadd [#allocation4], %s14
      %s16 = sshll.u32 [#allocation3], 4
      %s17 = int_to_ptr.vmem [resolvable:$true] %s16
      %22 = dma.hbm_to_vmem [thread:$0]  %s0, 256, %s17, [#allocation4], 128, 128, 8
    $region5: #{tpu_custom_call.1} parent=1 // pred_fallthru
      _
    // Predicated region
    $region6: #{tpu_custom_call.1} parent=1 // pred_check
      _
    $region7: #{tpu_custom_call.1} parent=1 // pred_check_branch
      %24 = sbr.rel (0) target = $region9
    $region8: #{tpu_custom_call.1} parent=1 // pred_region
      _
    $region9: #{tpu_custom_call.1} parent=1 // pred_fallthru
      _
    // Predicated region
    $region10: #{tpu_custom_call.1} parent=1 // pred_check
      _
    $region11: #{tpu_custom_call.1} parent=1 // pred_check_branch
      %26 = sbr.rel (0) target = $region13
    $region12: #{tpu_custom_call.1} parent=1 // pred_region
      _
    $region13: #{tpu_custom_call.1} parent=1 // pred_fallthru
      _
    // Predicated region
    $region14: #{tpu_custom_call.1} parent=1 // pred_check
      _
    $region15: #{tpu_custom_call.1} parent=1 // pred_check_branch
      %28 = sbr.rel (0) target = $region17
    $region16: #{tpu_custom_call.1} parent=1 // pred_region
      %29 = dma.done [#allocation4], 256
    $region17: #{tpu_custom_call.1} parent=1 // pred_fallthru
      _
    %v30 = vld [vmem:[%s1] sm:$0x1]
    %v31 = vld [vmem:[#allocation3] sm:$0xff]
    %v32 = vld [vmem:[#allocation3 + $0x8] sm:$0xff]
    %s33 = sld [smem:[#allocation2]]
    %v34 = vstv %s33
    %vm35 = vcmask 261120
    %v37 = vsel %vm35, %v30, 0
    %v40 = vsel %vm35, %v31, 0
    %v43 = vsel %vm35, %v32, 0
    %45 = vmatprep.subr.mxu0 0.0
    %46 = vmatpush1.xpose.msra.mxu0 %v40
    %47 = vmatprep.subr.mxu0 0.0
    %48 = vmatpush1.xpose.msra.mxu0 %v43
    %49 = vmatprep.subr.mxu0 0.0
    %50 = vmatpush1.xpose.msra.mxu0 0.0
    %51 = vmatprep.subr.mxu0 0.0
    %52 = vmatpush1.xpose.msra.mxu0 0.0
    %53 = vmatprep.subr.mxu0 0.0
    %54 = vmatpush1.xpose.msra.mxu0 0.0
    %55 = vmatprep.subr.mxu0 0.0
    %56 = vmatpush1.xpose.msra.mxu0 0.0
    %57 = vmatprep.subr.mxu0 0.0
    %58 = vmatpush1.xpose.msra.mxu0 0.0
    %59 = vmatprep.subr.mxu0 0.0
    %60 = vmatpush1.xpose.msra.mxu0 0.0
    %61 = vmatprep.subr.mxu0 0.0
    %62 = vmatpush1.xpose.msra.mxu0 0.0
    %63 = vmatprep.subr.mxu0 0.0
    %64 = vmatpush1.xpose.msra.mxu0 0.0
    %65 = vmatprep.subr.mxu0 0.0
    %66 = vmatpush1.xpose.msra.mxu0 0.0
    %67 = vmatprep.subr.mxu0 0.0
    %68 = vmatpush1.xpose.msra.mxu0 0.0
    %69 = vmatprep.subr.mxu0 0.0
    %70 = vmatpush1.xpose.msra.mxu0 0.0
    %71 = vmatprep.subr.mxu0 0.0
    %72 = vmatpush1.xpose.msra.mxu0 0.0
    %73 = vmatprep.subr.mxu0 0.0
    %74 = vmatpush1.xpose.msra.mxu0 0.0
    %75 = vmatprep.subr.mxu0 0.0
    %76 = vmatpush1.xpose.msra.mxu0 0.0
    %77 = vmatprep.subr.mxu0 0.0
    %78 = vmatpush1.xpose.msra.mxu0 0.0
    %79 = vmatprep.subr.mxu0 0.0
    %80 = vmatpush1.xpose.msra.mxu0 0.0
    %81 = vmatprep.subr.mxu0 0.0
    %82 = vmatpush1.xpose.msra.mxu0 0.0
    %83 = vmatprep.subr.mxu0 0.0
    %84 = vmatpush1.xpose.msra.mxu0 0.0
    %85 = vmatprep.subr.mxu0 0.0
    %86 = vmatpush1.xpose.msra.mxu0 0.0
    %87 = vmatprep.subr.mxu0 0.0
    %88 = vmatpush1.xpose.msra.mxu0 0.0
    %89 = vmatprep.subr.mxu0 0.0
    %90 = vmatpush1.xpose.msra.mxu0 0.0
    %91 = vmatprep.subr.mxu0 0.0
    %92 = vmatpush1.xpose.msra.mxu0 0.0
    %93 = vmatprep.subr.mxu0 0.0
    %94 = vmatpush1.xpose.msra.mxu0 0.0
    %95 = vmatprep.subr.mxu0 0.0
    %96 = vmatpush1.xpose.msra.mxu0 0.0
    %97 = vmatprep.subr.mxu0 0.0
    %98 = vmatpush1.xpose.msra.mxu0 0.0
    %99 = vmatprep.subr.mxu0 0.0
    %100 = vmatpush1.xpose.msra.mxu0 0.0
    %101 = vmatprep.subr.mxu0 0.0
    %102 = vmatpush1.xpose.msra.mxu0 0.0
    %103 = vmatprep.subr.mxu0 0.0
    %104 = vmatpush1.xpose.msra.mxu0 0.0
    %105 = vmatprep.subr.mxu0 0.0
    %106 = vmatpush1.xpose.msra.mxu0 0.0
    %107 = vmatprep.subr.mxu0 0.0
    %108 = vmatpush1.xpose.msra.mxu0 0.0
    %109 = vmatprep.mubr.f32.mxu0 0.0
    %110 = vmatmul.mubr.f32.gmra.mrb[0].mxu0 %v37
    %v111 = vpop.f32.mrb[0].mxu0
    %v112 = vadd.f32 %v34, %v111
    %v113 = vpop.f32.mrb[0].mxu0
    %114 = vdwg.mxu0
    %v115 = vtanh.pop %v112
    %vm116 = vcmask 122880
    %117 = vst.msk [vmem:[#allocation6] sm:$0x1] %vm116, %v115
    // Predicated region
    $region18: #{tpu_custom_call.1} parent=1 // pred_check
      _
    $region19: #{tpu_custom_call.1} parent=1 // pred_check_branch
      %119 = sbr.rel (0) target = $region21
    $region20: #{tpu_custom_call.1} parent=1 // pred_region
      %s121 = ssub.s32 16, 16
      %122 = vsyncadd [#allocation5], %s121
      %s124 = sshll.u32 [#allocation6], 4
      %s125 = int_to_ptr.vmem [resolvable:$true] %s124
      %127 = dma.vmem_to_hbm [thread:$0]  %s125, 16, %s3, [#allocation5]
    $region21: #{tpu_custom_call.1} parent=1 // pred_fallthru
      _
    // Predicated region
    $region22: #{tpu_custom_call.1} parent=1 // pred_check
      _
    $region23: #{tpu_custom_call.1} parent=1 // pred_check_branch
      %129 = sbr.rel (0) target = $region25
    $region24: #{tpu_custom_call.1} parent=1 // pred_region
      %130 = dma.done [#allocation5], 16
    $region25: #{tpu_custom_call.1} parent=1 // pred_fallthru
      _
    %131 = vsyncpa [#allocation4], 1
    %132 = vsyncpa [#allocation5], 1

</llo_original>
